<compile_context>
chip_gen: v6e
topology: v6e:2x2x1
jax: 0.10.0
libtpu: 0.0.40
codegen_flags: <defaults>
</compile_context>

<pallas_src>
import jax
import jax.numpy as jnp
from jax.experimental import pallas as pl
from jax.experimental.pallas import tpu as pltpu


def _round_up(x, m):
    return (x + m - 1) // m * m


def _physical_vmem_bytes():
    """Per-TensorCore physical VMEM (conservative if device kind is unknown)."""
    try:
        kind = jax.devices()[0].device_kind.lower()
    except Exception:
        kind = ""
    if "7" in kind:                    # TPU v7x: 64 MiB per TensorCore
        return 64 * 1024 * 1024
    return 128 * 1024 * 1024           # v5e / v6e: 128 MiB


def _meta_layer_kernel(a_ref, w_ref, out_ref):
    # Single fused MXU matmul, f32 accumulation, one cast at the end.
    out_ref[...] = jnp.dot(
        a_ref[...], w_ref[...], preferred_element_type=jnp.float32
    ).astype(out_ref.dtype)


def pack_meta_layer_params(T_1, M_1, *, compute_dtype=None):
    """Pack (T_1, M_1) into the stored kernel weight layout.  Do this ONCE.

    W_packed[i*s_dim + s, o] = T_1[s, i*out_dim + o]   (first K rows)
    W_packed[K + i, o]       = M_1[i, o]
    zero-padded to (Kp, out_p), both multiples of 128.
    """
    s_dim = T_1.shape[0]
    in_dim, out_dim = M_1.shape
    assert T_1.shape == (s_dim, in_dim * out_dim)

    K = in_dim * s_dim
    Kc = K + in_dim                        # augmented contraction: [z | feature]
    Kp = _round_up(Kc, 128)                # MXU-depth / lane aligned
    out_p = _round_up(out_dim, 128)        # lane-dense output

    T1p = jnp.transpose(
        T_1.reshape(s_dim, in_dim, out_dim), (1, 0, 2)
    ).reshape(K, out_dim)
    W = jnp.concatenate([T1p, M_1], axis=0)                     # (Kc, out_dim)
    W = jnp.pad(W, ((0, Kp - Kc), (0, out_p - out_dim)))
    if compute_dtype is not None:
        W = W.astype(compute_dtype)
    meta = dict(s_dim=s_dim, in_dim=in_dim, out_dim=out_dim,
                K=K, Kc=Kc, Kp=Kp, out_p=out_p)
    return W, meta


def _choose_tiles(B, Kp, out_p, in_bytes, out_bytes, sub, w_bufs, budget,
                  max_batch_block):
    # out-tile candidates: multiples of 128 dividing out_p, largest first.
    n128 = out_p // 128
    cand_out = [128 * d for d in range(n128, 0, -1) if n128 % d == 0]
    # batch-tile candidates: halve from the largest useful value down to `sub`.
    cand_tb, t = [], min(_round_up(B, sub), max_batch_block)
    while True:
        t = max(_round_up(t, sub), sub)
        if t not in cand_tb:
            cand_tb.append(t)
        if t <= sub:
            break
        t //= 2

    need = None
    for t_out in cand_out:               # prefer big t_out (fewer A re-reads)
        for tb in cand_tb:               # then big batch tiles
            need = (w_bufs * Kp * t_out * in_bytes     # weight tile buffer(s)
                    + 2 * tb * Kp * in_bytes           # A, double-buffered
                    + 2 * tb * t_out * out_bytes       # out, double-buffered
                    + (2 << 20))                       # pipeline slop
            if need <= budget:
                return tb, t_out, need
    # TODO(synk): for K so large that even a (Kp, 128) weight tile exceeds VMEM,
    # add an innermost "arbitrary" K grid axis with a VMEM f32 accumulator.
    return cand_tb[-1], cand_out[-1], need


def meta_layer_apply(W_packed, meta, signal, feature, *, max_batch_block=1024):
    """out[b, :] = feature[b] @ (reshape(signal[b] @ T_1) + M_1), as A @ W."""
    s_dim, in_dim, out_dim = meta["s_dim"], meta["in_dim"], meta["out_dim"]
    K, Kc, Kp, out_p = meta["K"], meta["Kc"], meta["Kp"], meta["out_p"]
    B = signal.shape[0]
    assert signal.shape == (B, s_dim)
    assert feature.shape == (B, in_dim)
    assert W_packed.shape == (Kp, out_p)

    out_dtype = signal.dtype
    cdtype = W_packed.dtype
    in_bytes = jnp.dtype(cdtype).itemsize
    out_bytes = jnp.dtype(out_dtype).itemsize
    sub = 16 if in_bytes == 2 else (32 if in_bytes == 1 else 8)

    # Augmented input A = [ z | feature | 0 ], z[b, i*s_dim+s] = feat[b,i]*sig[b,s].
    # Tiny VPU outer product; left to XLA so the kernel stays a pure GEMM.
    z = (feature[:, :, None] * signal[:, None, :]).reshape(B, K)
    A = jnp.concatenate([z, feature], axis=1)
    A = jnp.pad(A, ((0, 0), (0, Kp - Kc))).astype(cdtype)

    # --- generation-aware tile sizing ----------------------------------------
    phys = _physical_vmem_bytes()
    budget = phys - 16 * 1024 * 1024                   # headroom
    have_buffered = hasattr(pl, "Buffered")
    w_bufs = 1 if have_buffered else 2                 # weight is revisited
    tb, t_out, need = _choose_tiles(B, Kp, out_p, in_bytes, out_bytes, sub,
                                    w_bufs, budget, max_batch_block)

    Bp = _round_up(B, tb)
    if Bp != B:
        A = jnp.pad(A, ((0, Bp - B), (0, 0)))
    n_out = out_p // t_out
    n_b = Bp // tb

    # Weight tile index is constant across the (inner) batch axis -> revisited;
    # a single buffer halves its VMEM footprint.
    if have_buffered:
        w_spec = pl.BlockSpec((Kp, t_out), lambda j, i: (0, j),
                              pipeline_mode=pl.Buffered(1))
    else:
        w_spec = pl.BlockSpec((Kp, t_out), lambda j, i: (0, j))

    # When the out axis is tiled, shard IT across TensorCores (disjoint weight
    # halves per core); otherwise let the batch axis be the parallel one.
    dim_sem = ("parallel", "arbitrary") if n_out >= 2 else ("parallel", "parallel")

    flops = 2 * Bp * Kp * out_p
    bytes_accessed = (in_bytes * (Bp * Kp * n_out + Kp * out_p)
                      + out_bytes * Bp * out_p)
    vmem_limit = int(min(phys - 8 * 1024 * 1024,
                         max(need + (4 << 20), 32 * 1024 * 1024)))

    out_padded = pl.pallas_call(
        _meta_layer_kernel,
        out_shape=jax.ShapeDtypeStruct((Bp, out_p), out_dtype),
        grid=(n_out, n_b),                     # out outer, batch streams inner
        in_specs=[
            pl.BlockSpec((tb, Kp), lambda j, i: (i, 0)),   # A (activations)
            w_spec,                                        # W (resident per j)
        ],
        out_specs=pl.BlockSpec((tb, t_out), lambda j, i: (i, j)),
        compiler_params=pltpu.CompilerParams(
            dimension_semantics=dim_sem,
            vmem_limit_bytes=vmem_limit),
        cost_estimate=pl.CostEstimate(flops=flops, transcendentals=0,
                                      bytes_accessed=bytes_accessed),
    )(A, W_packed)

    return out_padded[:B, :out_dim]


def meta_layer(signal, feature, T_1, M_1, *, compute_dtype=None):
    """Convenience one-shot API (re-packs weights every call; prefer pack+apply)."""
    W_packed, meta = pack_meta_layer_params(T_1, M_1, compute_dtype=compute_dtype)
    return meta_layer_apply(W_packed, meta, signal, feature)


def _xavier_uniform(key, shape, dtype=jnp.float32):
    fan_in, fan_out = shape
    bound = (6.0 / (fan_in + fan_out)) ** 0.5
    return jax.random.uniform(key, shape, dtype, minval=-bound, maxval=bound)


def _reference(signal, feature, T_1, M_1):
    B = signal.shape[0]
    in_dim, out_dim = M_1.shape
    w_1 = (signal @ T_1).reshape(B, in_dim, out_dim)
    f = feature.reshape(B, 1, in_dim)
    return jnp.matmul(f, w_1 + M_1[None, :, :]).reshape(B, out_dim)


if __name__ == "__main__":
    B, S_DIM, IN_DIM, OUT_DIM = 8, 16, 4, 32

    key = jax.random.PRNGKey(0)
    k_t1, k_m1, k_sig, k_feat = jax.random.split(key, 4)

    T_1 = _xavier_uniform(k_t1, (S_DIM, IN_DIM * OUT_DIM))
    M_1 = _xavier_uniform(k_m1, (IN_DIM, OUT_DIM))
    signal = jax.random.normal(k_sig, (B, S_DIM), dtype=jnp.float32)
    feature = jax.random.normal(k_feat, (B, IN_DIM), dtype=jnp.float32)

    ref = _reference(signal, feature, T_1, M_1)

    # Stored-parameter layout is packed once; the apply path is jitted & reused.
    W_packed, meta = pack_meta_layer_params(T_1, M_1)
    apply_fn = jax.jit(lambda s, f: meta_layer_apply(W_packed, meta, s, f))
    out = jax.block_until_ready(apply_fn(signal, feature))

    assert out.shape == (B, OUT_DIM)
    assert jnp.allclose(out, ref, atol=2e-5, rtol=1e-4), "f32 mismatch vs reference"

    # Optional bf16 compute path (f32 MXU accumulate) — looser tolerance.
    out_bf16 = jax.block_until_ready(
        meta_layer(signal, feature, T_1, M_1, compute_dtype=jnp.bfloat16))
    assert jnp.allclose(out_bf16, ref, atol=1e-1, rtol=1e-1), "bf16 mismatch vs reference"

    print("KERNEL_OK")
</pallas_src>

<mosaic_0001>
module attributes {stable_mosaic.version = 11 : i64} {
  func.func @_meta_layer_kernel(%arg0: i32, %arg1: i32, %arg2: memref<8x128xf32, #tpu.memory_space<vmem>>, %arg3: memref<128x128xf32, #tpu.memory_space<vmem>>, %arg4: memref<8x128xf32, #tpu.memory_space<vmem>>) attributes {dimension_semantics = [#tpu.dimension_semantics<parallel>, #tpu.dimension_semantics<parallel>], iteration_bounds = array<i64: 1, 1>, scalar_prefetch = 0 : i64, scratch_operands = 0 : i64, tpu.core_type = #tpu.core_type<tc>, window_params = [{transform_indices = @transform_0, window_bounds = array<i64: 8, 128>}, {pipeline_mode = #tpu.pipeline_mode<synchronous>, transform_indices = @transform_1, window_bounds = array<i64: 128, 128>}, {transform_indices = @transform_2, window_bounds = array<i64: 8, 128>}]} {
    %c0 = arith.constant 0 : index
    %c0_0 = arith.constant 0 : index
    %0 = vector.load %arg2[%c0, %c0_0] : memref<8x128xf32, #tpu.memory_space<vmem>>, vector<8x128xf32>
    %c0_1 = arith.constant 0 : index
    %c0_2 = arith.constant 0 : index
    %1 = vector.load %arg3[%c0_1, %c0_2] : memref<128x128xf32, #tpu.memory_space<vmem>>, vector<128x128xf32>
    %cst = arith.constant dense<0.000000e+00> : vector<8x128xf32>
    %2 = tpu.matmul %0, %1, %cst {dimension_numbers = #tpu.dot_dimension_numbers<[1], [0], [0], [1], [0, 0, 1, 1], [], []>} : vector<8x128xf32>, vector<128x128xf32>, vector<8x128xf32> -> vector<8x128xf32>
    %c0_3 = arith.constant 0 : index
    %c0_4 = arith.constant 0 : index
    %3 = vector.load %arg4[%c0_3, %c0_4] : memref<8x128xf32, #tpu.memory_space<vmem>>, vector<8x128xf32>
    tpu.vector_store %arg4[%c0_3, %c0_4], %2 {strides = array<i32>} : memref<8x128xf32, #tpu.memory_space<vmem>>, vector<8x128xf32>,
    return
  }
  func.func @transform_0(%arg0: i32, %arg1: i32) -> (i32, i32) {
    %c0_i32 = arith.constant 0 : i32
    %c0_i32_0 = arith.constant 0 : i32
    return %arg1, %c0_i32 : i32, i32
  }
  func.func @transform_1(%arg0: i32, %arg1: i32) -> (i32, i32) {
    %c0_i32 = arith.constant 0 : i32
    %c0_i32_0 = arith.constant 0 : i32
    return %c0_i32, %arg0 : i32, i32
  }
  func.func @transform_2(%arg0: i32, %arg1: i32) -> (i32, i32) {
    %c0_i32 = arith.constant 0 : i32
    return %arg1, %arg0 : i32, i32
  }
}

</mosaic_0001>

<llo_original>
// kernel: _lambda_.1
$region0: #{_lambda_.1}
  #allocation0 [shape = 'u32[]', space=smem, size = 0x4, offset = 0x4, fixed_abs, tag = 'smem constant byte address 0x4 - core index']
  #allocation1 [shape = 'u32[144,128]{1,0:T(1,128)}', space=vmem, size = 0x12000, scoped, tag = 'internal scratch']
  %s0 = inlined_call_operand.vmem [shape: f32[8,128], index: 0, kind: input, shape index: {}]
  %s1 = inlined_call_operand.hbm [shape: f32[128,128], index: 1, kind: input, shape index: {}]
  %s2 = inlined_call_operand.hbm [shape: f32[8,128], index: 2, kind: output, shape index: {}]
  %s3 = sld [smem:[#allocation0]]
  $region22: #{_lambda_.1} parent=0
    _
  %s5 = ssub.s32 1, %s3
  %s6 = scalar_select 0, %s5, %s3
  $region1: #{_lambda_.1} parent=0
    #allocation2 [shape = 'u8[65536]{0}', space=vmem, size = 0x10000, scoped, tag = 'input window, operand 1, single buffered']
    #allocation3 [shape = 's32[1]{0}', space=sflag, size = 0x4, scoped, tag = 'scoped memory for _lambda_.1']
    #allocation4 [shape = 's32[1]{0}', space=sflag, size = 0x4, scoped, tag = 'scoped memory for _lambda_.1']
    #allocation5 [shape = 'u8[4096]{0}', space=vmem, size = 0x1000, scoped, tag = 'output window, operand 0, single buffered']
    %7 = vsyncpa [#allocation3], 0
    %8 = vsyncpa [#allocation4], 0
    // Predicated region
    $region2: #{_lambda_.1} parent=1 // pred_check
      _
    $region3: #{_lambda_.1} parent=1 // pred_check_branch
      %10 = sbr.rel (0) target = $region5
    $region4: #{_lambda_.1} parent=1 // pred_region
      _
    $region5: #{_lambda_.1} parent=1 // pred_fallthru
      _
    // Predicated region
    $region6: #{_lambda_.1} parent=1 // pred_check
      _
    $region7: #{_lambda_.1} parent=1 // pred_check_branch
      %12 = sbr.rel (0) target = $region9
    $region8: #{_lambda_.1} parent=1 // pred_region
      %s14 = ssub.s32 2048, 2048
      %15 = vsyncadd [#allocation3], %s14
      %s16 = sshll.u32 [#allocation2], 4
      %s17 = int_to_ptr.vmem [resolvable:$true] %s16
      %22 = dma.hbm_to_vmem [thread:$0]  %s1, 2048, %s17, [#allocation3], 128, 128, 8
    $region9: #{_lambda_.1} parent=1 // pred_fallthru
      _
    // Predicated region
    $region10: #{_lambda_.1} parent=1 // pred_check
      _
    $region11: #{_lambda_.1} parent=1 // pred_check_branch
      %24 = sbr.rel (0) target = $region13
    $region12: #{_lambda_.1} parent=1 // pred_region
      %25 = dma.done [#allocation3], 2048
    $region13: #{_lambda_.1} parent=1 // pred_fallthru
      _
    %v26 = vld [vmem:[%s0] sm:$0xff]
    %v27 = vld [vmem:[#allocation2] sm:$0xff]
    %v28 = vld [vmem:[#allocation2 + $0x8] sm:$0xff]
    %v29 = vld [vmem:[#allocation2 + $0x10] sm:$0xff]
    %v30 = vld [vmem:[#allocation2 + $0x18] sm:$0xff]
    %v31 = vld [vmem:[#allocation2 + $0x20] sm:$0xff]
    %v32 = vld [vmem:[#allocation2 + $0x28] sm:$0xff]
    %v33 = vld [vmem:[#allocation2 + $0x30] sm:$0xff]
    %v34 = vld [vmem:[#allocation2 + $0x38] sm:$0xff]
    %v35 = vld [vmem:[#allocation2 + $0x40] sm:$0xff]
    %v36 = vld [vmem:[#allocation2 + $0x48] sm:$0xff]
    %v37 = vld [vmem:[#allocation2 + $0x50] sm:$0xff]
    %v38 = vld [vmem:[#allocation2 + $0x58] sm:$0xff]
    %v39 = vld [vmem:[#allocation2 + $0x60] sm:$0xff]
    %v40 = vld [vmem:[#allocation2 + $0x68] sm:$0xff]
    %v41 = vld [vmem:[#allocation2 + $0x70] sm:$0xff]
    %v42 = vld [vmem:[#allocation2 + $0x78] sm:$0xff]
    %43 = vmatprep.subr.mxu0 0.0
    %44 = vmatpush1.msra.mxu0 %v42
    %45 = vmatprep.subr.mxu0 0.0
    %46 = vmatpush1.msra.mxu0 %v41
    %47 = vmatprep.subr.mxu0 0.0
    %48 = vmatpush1.msra.mxu0 %v40
    %49 = vmatprep.subr.mxu0 0.0
    %50 = vmatpush1.msra.mxu0 %v39
    %51 = vmatprep.subr.mxu0 0.0
    %52 = vmatpush1.msra.mxu0 %v38
    %53 = vmatprep.subr.mxu0 0.0
    %54 = vmatpush1.msra.mxu0 %v37
    %55 = vmatprep.subr.mxu0 0.0
    %56 = vmatpush1.msra.mxu0 %v36
    %57 = vmatprep.subr.mxu0 0.0
    %58 = vmatpush1.msra.mxu0 %v35
    %59 = vmatprep.subr.mxu0 0.0
    %60 = vmatpush1.msra.mxu0 %v34
    %61 = vmatprep.subr.mxu0 0.0
    %62 = vmatpush1.msra.mxu0 %v33
    %63 = vmatprep.subr.mxu0 0.0
    %64 = vmatpush1.msra.mxu0 %v32
    %65 = vmatprep.subr.mxu0 0.0
    %66 = vmatpush1.msra.mxu0 %v31
    %67 = vmatprep.subr.mxu0 0.0
    %68 = vmatpush1.msra.mxu0 %v30
    %69 = vmatprep.subr.mxu0 0.0
    %70 = vmatpush1.msra.mxu0 %v29
    %71 = vmatprep.subr.mxu0 0.0
    %72 = vmatpush1.msra.mxu0 %v28
    %73 = vmatprep.subr.mxu0 0.0
    %74 = vmatpush1.msra.mxu0 %v27
    %75 = vmatprep.subr.mxu0 0.0
    %76 = vmatpush2.msra.mxu0 0.0
    %77 = vmatprep.subr.mxu0 0.0
    %78 = vmatpush2.msra.mxu0 0.0
    %79 = vmatprep.subr.mxu0 0.0
    %80 = vmatpush2.msra.mxu0 0.0
    %81 = vmatprep.subr.mxu0 0.0
    %82 = vmatpush2.msra.mxu0 0.0
    %83 = vmatprep.subr.mxu0 0.0
    %84 = vmatpush2.msra.mxu0 0.0
    %85 = vmatprep.subr.mxu0 0.0
    %86 = vmatpush2.msra.mxu0 0.0
    %87 = vmatprep.subr.mxu0 0.0
    %88 = vmatpush2.msra.mxu0 0.0
    %89 = vmatprep.subr.mxu0 0.0
    %90 = vmatpush2.msra.mxu0 0.0
    %91 = vmatprep.subr.mxu0 0.0
    %92 = vmatpush2.msra.mxu0 0.0
    %93 = vmatprep.subr.mxu0 0.0
    %94 = vmatpush2.msra.mxu0 0.0
    %95 = vmatprep.subr.mxu0 0.0
    %96 = vmatpush2.msra.mxu0 0.0
    %97 = vmatprep.subr.mxu0 0.0
    %98 = vmatpush2.msra.mxu0 0.0
    %99 = vmatprep.subr.mxu0 0.0
    %100 = vmatpush2.msra.mxu0 0.0
    %101 = vmatprep.subr.mxu0 0.0
    %102 = vmatpush2.msra.mxu0 0.0
    %103 = vmatprep.subr.mxu0 0.0
    %104 = vmatpush2.msra.mxu0 0.0
    %105 = vmatprep.subr.mxu0 0.0
    %106 = vmatpush2.msra.mxu0 0.0
    %107 = vmatprep.mubr.f32.mxu0 0.0
    %108 = vmatmul.mubr.f32.gmra.mxu0 %v26
    %v109 = vpop.f32.mrf.mxu0
    %v110 = vadd.f32 0.0, %v109
    %v111 = vpop.f32.mrf.mxu0
    %112 = vdwg.mxu0
    %113 = vst [vmem:[#allocation5] sm:$0xff] %v110
    // Predicated region
    $region14: #{_lambda_.1} parent=1 // pred_check
      _
    $region15: #{_lambda_.1} parent=1 // pred_check_branch
      %115 = sbr.rel (0) target = $region17
    $region16: #{_lambda_.1} parent=1 // pred_region
      %s117 = ssub.s32 128, 128
      %118 = vsyncadd [#allocation4], %s117
      %s120 = sshll.u32 [#allocation5], 4
      %s121 = int_to_ptr.vmem [resolvable:$true] %s120
      %123 = dma.vmem_to_hbm [thread:$0]  %s121, 128, %s2, [#allocation4]
    $region17: #{_lambda_.1} parent=1 // pred_fallthru
      _
    // Predicated region
    $region18: #{_lambda_.1} parent=1 // pred_check
      _
    $region19: #{_lambda_.1} parent=1 // pred_check_branch
      %125 = sbr.rel (0) target = $region21
    $region20: #{_lambda_.1} parent=1 // pred_region
      %126 = dma.done [#allocation4], 128
    $region21: #{_lambda_.1} parent=1 // pred_fallthru
      _
    %127 = vsyncpa [#allocation3], 1
    %128 = vsyncpa [#allocation4], 1

</llo_original>
